<compile_context>
chip_gen: v7x
topology: tpu7x:2x2x1
jax: 0.10.0
libtpu: 0.0.40
codegen_flags: <defaults>
</compile_context>

<pallas_src>
import jax
import jax.numpy as jnp
from jax import lax
from jax.experimental import pallas as pl
from jax.experimental.pallas import tpu as pltpu


def _attention_critic_kernel(
    xs_ref,      # (1, H, TN) static_hidden     (native channel-major layout)
    xc_ref,      # (1, H, TN) static_ch_l
    xd_ref,      # (1, H, TN) dynamic_hidden
    bq_ref,      # (1, H, 1)  per-batch bias: b_dex + Linear_q(decoder_hidden)
    w_cat_ref,   # (H, 2H)    [w_ref | w_chl] fused projection weight [out, in]
    b_ech_ref,   # (1, H, 1)  b_ref + b_chl
    w_dex_ref,   # (H, H)     project_d_ex weight [out, in]
    v_ref,       # (1, 1, H)  v parameter
    ech_ref,     # (1, H, TN) output: e + ch_l
    logits_ref,  # (1, 1, TN) output: logits (lane-dense)
):
    xs = xs_ref[0]           # (H, TN)
    xc = xc_ref[0]           # (H, TN)
    xd = xd_ref[0]           # (H, TN)

    # y[o, n] = sum_i W[o, i] * x[i, n]   (Conv1d kernel_size=1 in NCL layout)
    contract = (((1,), (0,)), ((), ()))

    # Fused e + ch_l: one MXU call with K = 2H.
    xcat = jnp.concatenate([xs, xc], axis=0)                      # (2H, TN)
    ech = lax.dot_general(w_cat_ref[...], xcat, contract,
                          preferred_element_type=jnp.float32)
    ech = ech + b_ech_ref[0]                                      # (H, TN)
    ech_ref[0] = ech.astype(ech_ref.dtype)

    # d_ex projection with the hoisted query + b_dex folded into its bias.
    dx = lax.dot_general(w_dex_ref[...], xd, contract,
                         preferred_element_type=jnp.float32)
    dx = dx + bq_ref[0]                                           # (H, TN)

    t = jnp.tanh(ech + dx)                                        # (H, TN)

    # u[n] = sum_h v[h] * t[h, n]  -> (1, TN), lane-dense store.
    u = lax.dot_general(v_ref[0], t, contract,
                        preferred_element_type=jnp.float32)       # (1, TN)
    logits_ref[0] = u.astype(logits_ref.dtype)


def attention_critic_forward(static_hidden, static_ch_l, dynamic_hidden,
                             decoder_hidden, params, *, use_tahn=False, C=10,
                             n_tile=512):
    """Inputs in PyTorch layout (B, H, N) / (B, H).

    Returns (e + ch_l with shape (B, H, N), logits with shape (B, N)).
    """
    B, H, N = static_hidden.shape
    dt = jnp.float32

    xs = static_hidden.astype(dt)
    xc = static_ch_l.astype(dt)
    xd = dynamic_hidden.astype(dt)

    # --- tiny host-side precompute (no full-tensor HBM round trips) ---------
    # Fuse e / ch_l projection weights along the contraction dim.
    w_cat = jnp.concatenate(
        [params["w_ref"].astype(dt), params["w_chl"].astype(dt)], axis=1)  # (H, 2H)
    b_ech = (params["b_ref"] + params["b_chl"]).astype(dt).reshape(1, H, 1)
    w_dex = params["w_dex"].astype(dt)                                     # (H, H)
    # Hoist the query projection (M=1 matmul) and fold it into the d_ex bias.
    q = decoder_hidden.astype(dt) @ params["w_q"].astype(dt).T \
        + params["b_q"].astype(dt)                                         # (B, H)
    bq = (q + params["b_dex"].astype(dt)).reshape(B, H, 1)                 # (B, H, 1)
    v = params["v"].astype(dt).reshape(1, 1, H)

    # --- node-axis tiling ---------------------------------------------------
    TN = N if N <= n_tile else n_tile        # TN == N (full) or multiple of 128
    n_tiles = pl.cdiv(N, TN)

    x_spec = pl.BlockSpec((1, H, TN), lambda b, n: (b, 0, n))
    bq_spec = pl.BlockSpec((1, H, 1), lambda b, n: (b, 0, 0))
    wcat_spec = pl.BlockSpec((H, 2 * H), lambda b, n: (0, 0))
    bech_spec = pl.BlockSpec((1, H, 1), lambda b, n: (0, 0, 0))
    wdex_spec = pl.BlockSpec((H, H), lambda b, n: (0, 0))
    v_spec = pl.BlockSpec((1, 1, H), lambda b, n: (0, 0, 0))

    ech, logits = pl.pallas_call(
        _attention_critic_kernel,
        grid=(B, n_tiles),
        in_specs=[x_spec, x_spec, x_spec, bq_spec,
                  wcat_spec, bech_spec, wdex_spec, v_spec],
        out_specs=[
            pl.BlockSpec((1, H, TN), lambda b, n: (b, 0, n)),   # e + ch_l
            pl.BlockSpec((1, 1, TN), lambda b, n: (b, 0, n)),   # logits
        ],
        out_shape=[
            jax.ShapeDtypeStruct((B, H, N), dt),
            jax.ShapeDtypeStruct((B, 1, N), dt),
        ],
        compiler_params=pltpu.CompilerParams(
            dimension_semantics=("parallel", "parallel"),
            # Above the 16/32 MiB scoped defaults, below v7x's 64 MiB physical.
            vmem_limit_bytes=48 * 1024 * 1024),
    )(xs, xc, xd, bq, w_cat, b_ech, w_dex, v)

    logits = logits.reshape(B, N)
    if use_tahn:
        logits = C * jnp.tanh(logits)
    return ech, logits


def _reference_forward(static_hidden, static_ch_l, dynamic_hidden,
                       decoder_hidden, params):
    """Pure-JAX reference mirroring the PyTorch forward (use_tahn=False)."""
    def conv1(x, w, b):   # x: (B, H, N), w: (out, in), b: (out,)
        return jnp.einsum("oi,bin->bon", w, x) + b[None, :, None]

    e = conv1(static_hidden, params["w_ref"], params["b_ref"])
    ch_l = conv1(static_ch_l, params["w_chl"], params["b_chl"])
    d_ex = conv1(dynamic_hidden, params["w_dex"], params["b_dex"])
    q = decoder_hidden @ params["w_q"].T + params["b_q"]          # (B, H)
    t = jnp.tanh(e + q[:, :, None] + d_ex + ch_l)
    u = jnp.einsum("h,bhn->bn", params["v"], t)
    return e + ch_l, u


if __name__ == "__main__":
    B, H, N = 2, 32, 8

    key = jax.random.PRNGKey(0)
    keys = jax.random.split(key, 16)
    scale = 1.0 / jnp.sqrt(H)

    # Deterministic synthetic parameters (four HxH projections, their biases,
    # and the (1,1,H) `v` parameter — kept dense/random so the full tanh/bmm
    # path is exercised instead of PyTorch's zero-init `v`).
    params = {
        "w_ref": jax.random.uniform(keys[0], (H, H), minval=-scale, maxval=scale),
        "b_ref": jax.random.uniform(keys[1], (H,), minval=-scale, maxval=scale),
        "w_chl": jax.random.uniform(keys[2], (H, H), minval=-scale, maxval=scale),
        "b_chl": jax.random.uniform(keys[3], (H,), minval=-scale, maxval=scale),
        "w_dex": jax.random.uniform(keys[4], (H, H), minval=-scale, maxval=scale),
        "b_dex": jax.random.uniform(keys[5], (H,), minval=-scale, maxval=scale),
        "w_q": jax.random.uniform(keys[6], (H, H), minval=-scale, maxval=scale),
        "b_q": jax.random.uniform(keys[7], (H,), minval=-scale, maxval=scale),
        "v": jax.random.normal(keys[8], (H,)) * 0.1,
    }
    params = {k: v.astype(jnp.float32) for k, v in params.items()}

    static_hidden = jax.random.normal(keys[9], (B, H, N), dtype=jnp.float32)
    static_ch_l = jax.random.normal(keys[10], (B, H, N), dtype=jnp.float32)
    dynamic_hidden = jax.random.normal(keys[11], (B, H, N), dtype=jnp.float32)
    decoder_hidden = jax.random.normal(keys[12], (B, H), dtype=jnp.float32)

    e_chl, logits = attention_critic_forward(
        static_hidden, static_ch_l, dynamic_hidden, decoder_hidden, params)
    jax.block_until_ready((e_chl, logits))

    e_chl_ref, logits_ref = _reference_forward(
        static_hidden, static_ch_l, dynamic_hidden, decoder_hidden, params)

    assert e_chl.shape == (B, H, N) and logits.shape == (B, N)
    assert jnp.allclose(e_chl, e_chl_ref, atol=1e-4, rtol=1e-4)
    assert jnp.allclose(logits, logits_ref, atol=1e-4, rtol=1e-4)

    print("KERNEL_OK")
</pallas_src>

<mosaic_0001>
module attributes {stable_mosaic.version = 11 : i64} {
  func.func @_attention_critic_kernel(%arg0: i32, %arg1: i32, %arg2: memref<1x32x8xf32, #tpu.memory_space<vmem>>, %arg3: memref<1x32x8xf32, #tpu.memory_space<vmem>>, %arg4: memref<1x32x8xf32, #tpu.memory_space<vmem>>, %arg5: memref<1x32x1xf32, #tpu.memory_space<vmem>>, %arg6: memref<32x64xf32, #tpu.memory_space<vmem>>, %arg7: memref<1x32x1xf32, #tpu.memory_space<vmem>>, %arg8: memref<32x32xf32, #tpu.memory_space<vmem>>, %arg9: memref<1x1x32xf32, #tpu.memory_space<vmem>>, %arg10: memref<1x32x8xf32, #tpu.memory_space<vmem>>, %arg11: memref<1x1x8xf32, #tpu.memory_space<vmem>>) attributes {dimension_semantics = [#tpu.dimension_semantics<parallel>, #tpu.dimension_semantics<parallel>], iteration_bounds = array<i64: 2, 1>, scalar_prefetch = 0 : i64, scratch_operands = 0 : i64, tpu.core_type = #tpu.core_type<tc>, window_params = [{transform_indices = @transform_0, window_bounds = array<i64: 1, 32, 8>}, {transform_indices = @transform_1, window_bounds = array<i64: 1, 32, 8>}, {transform_indices = @transform_2, window_bounds = array<i64: 1, 32, 8>}, {transform_indices = @transform_3, window_bounds = array<i64: 1, 32, 1>}, {pipeline_mode = #tpu.pipeline_mode<synchronous>, transform_indices = @transform_4, window_bounds = array<i64: 32, 64>}, {pipeline_mode = #tpu.pipeline_mode<synchronous>, transform_indices = @transform_5, window_bounds = array<i64: 1, 32, 1>}, {pipeline_mode = #tpu.pipeline_mode<synchronous>, transform_indices = @transform_6, window_bounds = array<i64: 32, 32>}, {pipeline_mode = #tpu.pipeline_mode<synchronous>, transform_indices = @transform_7, window_bounds = array<i64: 1, 1, 32>}, {transform_indices = @transform_8, window_bounds = array<i64: 1, 32, 8>}, {transform_indices = @transform_9, window_bounds = array<i64: 1, 1, 8>}]} {
    %c0 = arith.constant 0 : index
    %c0_0 = arith.constant 0 : index
    %c0_1 = arith.constant 0 : index
    %0 = vector.load %arg2[%c0, %c0_0, %c0_1] : memref<1x32x8xf32, #tpu.memory_space<vmem>>, vector<1x32x8xf32>
    %1 = vector.shape_cast %0 : vector<1x32x8xf32> to vector<32x8xf32>
    %c0_2 = arith.constant 0 : index
    %c0_3 = arith.constant 0 : index
    %c0_4 = arith.constant 0 : index
    %2 = vector.load %arg3[%c0_2, %c0_3, %c0_4] : memref<1x32x8xf32, #tpu.memory_space<vmem>>, vector<1x32x8xf32>
    %3 = vector.shape_cast %2 : vector<1x32x8xf32> to vector<32x8xf32>
    %c0_5 = arith.constant 0 : index
    %c0_6 = arith.constant 0 : index
    %c0_7 = arith.constant 0 : index
    %4 = vector.load %arg4[%c0_5, %c0_6, %c0_7] : memref<1x32x8xf32, #tpu.memory_space<vmem>>, vector<1x32x8xf32>
    %5 = vector.shape_cast %4 : vector<1x32x8xf32> to vector<32x8xf32>
    %6 = tpu.concatenate %1, %3 in 0 : vector<32x8xf32>, vector<32x8xf32> -> vector<64x8xf32>
    %c0_8 = arith.constant 0 : index
    %c0_9 = arith.constant 0 : index
    %7 = vector.load %arg6[%c0_8, %c0_9] : memref<32x64xf32, #tpu.memory_space<vmem>>, vector<32x64xf32>
    %cst = arith.constant dense<0.000000e+00> : vector<32x8xf32>
    %8 = tpu.matmul %7, %6, %cst {dimension_numbers = #tpu.dot_dimension_numbers<[1], [0], [0], [1], [0, 0, 1, 1], [], []>} : vector<32x64xf32>, vector<64x8xf32>, vector<32x8xf32> -> vector<32x8xf32>
    %c0_10 = arith.constant 0 : index
    %c0_11 = arith.constant 0 : index
    %c0_12 = arith.constant 0 : index
    %9 = vector.load %arg7[%c0_10, %c0_11, %c0_12] : memref<1x32x1xf32, #tpu.memory_space<vmem>>, vector<1x32x1xf32>
    %10 = vector.shape_cast %9 : vector<1x32x1xf32> to vector<32x1xf32>
    %11 = vector.broadcast %10 : vector<32x1xf32> to vector<32x8xf32>
    %12 = arith.addf %8, %11 : vector<32x8xf32>
    %c0_13 = arith.constant 0 : index
    %c0_14 = arith.constant 0 : index
    %c0_15 = arith.constant 0 : index
    %13 = vector.load %arg10[%c0_13, %c0_14, %c0_15] : memref<1x32x8xf32, #tpu.memory_space<vmem>>, vector<1x32x8xf32>
    %14 = vector.shape_cast %13 : vector<1x32x8xf32> to vector<32x8xf32>
    %15 = vector.shape_cast %12 : vector<32x8xf32> to vector<1x32x8xf32>
    tpu.vector_store %arg10[%c0_13, %c0_14, %c0_15], %15 {strides = array<i32>} : memref<1x32x8xf32, #tpu.memory_space<vmem>>, vector<1x32x8xf32>,
    %c0_16 = arith.constant 0 : index
    %c0_17 = arith.constant 0 : index
    %16 = vector.load %arg8[%c0_16, %c0_17] : memref<32x32xf32, #tpu.memory_space<vmem>>, vector<32x32xf32>
    %cst_18 = arith.constant dense<0.000000e+00> : vector<32x8xf32>
    %17 = tpu.matmul %16, %5, %cst_18 {dimension_numbers = #tpu.dot_dimension_numbers<[1], [0], [0], [1], [0, 0, 1, 1], [], []>} : vector<32x32xf32>, vector<32x8xf32>, vector<32x8xf32> -> vector<32x8xf32>
    %c0_19 = arith.constant 0 : index
    %c0_20 = arith.constant 0 : index
    %c0_21 = arith.constant 0 : index
    %18 = vector.load %arg5[%c0_19, %c0_20, %c0_21] : memref<1x32x1xf32, #tpu.memory_space<vmem>>, vector<1x32x1xf32>
    %19 = vector.shape_cast %18 : vector<1x32x1xf32> to vector<32x1xf32>
    %20 = vector.broadcast %19 : vector<32x1xf32> to vector<32x8xf32>
    %21 = arith.addf %17, %20 : vector<32x8xf32>
    %22 = arith.addf %12, %21 : vector<32x8xf32>
    %23 = math.tanh %22 : vector<32x8xf32>
    %c0_22 = arith.constant 0 : index
    %c0_23 = arith.constant 0 : index
    %c0_24 = arith.constant 0 : index
    %24 = vector.load %arg9[%c0_22, %c0_23, %c0_24] : memref<1x1x32xf32, #tpu.memory_space<vmem>>, vector<1x1x32xf32>
    %25 = vector.shape_cast %24 : vector<1x1x32xf32> to vector<1x32xf32>
    %cst_25 = arith.constant dense<0.000000e+00> : vector<1x8xf32>
    %26 = tpu.matmul %25, %23, %cst_25 {dimension_numbers = #tpu.dot_dimension_numbers<[1], [0], [0], [1], [0, 0, 1, 1], [], []>} : vector<1x32xf32>, vector<32x8xf32>, vector<1x8xf32> -> vector<1x8xf32>
    %c0_26 = arith.constant 0 : index
    %c0_27 = arith.constant 0 : index
    %c0_28 = arith.constant 0 : index
    %27 = vector.load %arg11[%c0_26, %c0_27, %c0_28] : memref<1x1x8xf32, #tpu.memory_space<vmem>>, vector<1x1x8xf32>
    %28 = vector.shape_cast %27 : vector<1x1x8xf32> to vector<1x8xf32>
    %29 = vector.shape_cast %26 : vector<1x8xf32> to vector<1x1x8xf32>
    tpu.vector_store %arg11[%c0_26, %c0_27, %c0_28], %29 {strides = array<i32>} : memref<1x1x8xf32, #tpu.memory_space<vmem>>, vector<1x1x8xf32>,
    return
  }
  func.func @transform_0(%arg0: i32, %arg1: i32) -> (i32, i32, i32) {
    %c0_i32 = arith.constant 0 : i32
    %c0_i32_0 = arith.constant 0 : i32
    return %arg0, %c0_i32, %arg1 : i32, i32, i32
  }
  func.func @transform_1(%arg0: i32, %arg1: i32) -> (i32, i32, i32) {
    %c0_i32 = arith.constant 0 : i32
    %c0_i32_0 = arith.constant 0 : i32
    return %arg0, %c0_i32, %arg1 : i32, i32, i32
  }
  func.func @transform_2(%arg0: i32, %arg1: i32) -> (i32, i32, i32) {
    %c0_i32 = arith.constant 0 : i32
    %c0_i32_0 = arith.constant 0 : i32
    return %arg0, %c0_i32, %arg1 : i32, i32, i32
  }
  func.func @transform_3(%arg0: i32, %arg1: i32) -> (i32, i32, i32) {
    %c0_i32 = arith.constant 0 : i32
    %c0_i32_0 = arith.constant 0 : i32
    %c0_i32_1 = arith.constant 0 : i32
    return %arg0, %c0_i32, %c0_i32_0 : i32, i32, i32
  }
  func.func @transform_4(%arg0: i32, %arg1: i32) -> (i32, i32) {
    %c0_i32 = arith.constant 0 : i32
    %c0_i32_0 = arith.constant 0 : i32
    %c0_i32_1 = arith.constant 0 : i32
    return %c0_i32, %c0_i32_0 : i32, i32
  }
  func.func @transform_5(%arg0: i32, %arg1: i32) -> (i32, i32, i32) {
    %c0_i32 = arith.constant 0 : i32
    %c0_i32_0 = arith.constant 0 : i32
    %c0_i32_1 = arith.constant 0 : i32
    %c0_i32_2 = arith.constant 0 : i32
    return %c0_i32, %c0_i32_0, %c0_i32_1 : i32, i32, i32
  }
  func.func @transform_6(%arg0: i32, %arg1: i32) -> (i32, i32) {
    %c0_i32 = arith.constant 0 : i32
    %c0_i32_0 = arith.constant 0 : i32
    %c0_i32_1 = arith.constant 0 : i32
    return %c0_i32, %c0_i32_0 : i32, i32
  }
  func.func @transform_7(%arg0: i32, %arg1: i32) -> (i32, i32, i32) {
    %c0_i32 = arith.constant 0 : i32
    %c0_i32_0 = arith.constant 0 : i32
    %c0_i32_1 = arith.constant 0 : i32
    %c0_i32_2 = arith.constant 0 : i32
    return %c0_i32, %c0_i32_0, %c0_i32_1 : i32, i32, i32
  }
  func.func @transform_8(%arg0: i32, %arg1: i32) -> (i32, i32, i32) {
    %c0_i32 = arith.constant 0 : i32
    %c0_i32_0 = arith.constant 0 : i32
    return %arg0, %c0_i32, %arg1 : i32, i32, i32
  }
  func.func @transform_9(%arg0: i32, %arg1: i32) -> (i32, i32, i32) {
    %c0_i32 = arith.constant 0 : i32
    %c0_i32_0 = arith.constant 0 : i32
    return %arg0, %c0_i32, %arg1 : i32, i32, i32
  }
}

</mosaic_0001>

<llo_original>
// kernel: tpu_custom_call.1
$region0: #{tpu_custom_call.1}
  #allocation0 [shape = 'u32[]', space=smem, size = 0x4, offset = 0x4, fixed_abs, tag = 'smem constant byte address 0x4 - core index']
  #allocation1 [shape = 'u32[144,128]{1,0:T(1,128)}', space=vmem, size = 0x12000, scoped, tag = 'internal scratch']
  %s0 = inlined_call_operand.vmem [shape: f32[2,32,8], index: 0, kind: input, shape index: {}]
  %s1 = inlined_call_operand.vmem [shape: f32[2,32,8], index: 1, kind: input, shape index: {}]
  %s2 = inlined_call_operand.vmem [shape: f32[2,32,8], index: 2, kind: input, shape index: {}]
  %s3 = inlined_call_operand.vmem [shape: f32[2,32,1], index: 3, kind: input, shape index: {}]
  %s4 = inlined_call_operand.vmem [shape: f32[32,64], index: 4, kind: input, shape index: {}]
  %s5 = inlined_call_operand.vmem [shape: f32[1,32,1], index: 5, kind: input, shape index: {}]
  %s6 = inlined_call_operand.vmem [shape: f32[32,32], index: 6, kind: input, shape index: {}]
  %s7 = inlined_call_operand.vmem [shape: f32[1,1,32], index: 7, kind: input, shape index: {}]
  %s8 = inlined_call_operand.vmem [shape: f32[2,32,8], index: 8, kind: output, shape index: {0}]
  %s9 = inlined_call_operand.hbm [shape: f32[2,1,8], index: 9, kind: output, shape index: {1}]
  %10 = xla_tuple %s8, %s9
  %s11 = sld [smem:[#allocation0]]
  $region73: #{tpu_custom_call.1} parent=0
    _
  %s13 = ssub.s32 1, %s11
  %s14 = scalar_select 0, %s13, %s11
  $region1: #{tpu_custom_call.1} parent=0
    #allocation2 [shape = 'u8[1024]{0}', space=vmem, size = 0x400, scoped, tag = 'output window, operand 1']
    #allocation3 [shape = 's32[2]{0}', space=sflag, size = 0x8, scoped, tag = 'scoped memory for tpu_custom_call.1']
    %15 = vsyncpa [#allocation3], 0
    %s16 = scalar_lea.sflag [#allocation3], 1
    %17 = vsyncpa %s16, 0
    loop: start=0, step=1, limit=4
    $region2: #{tpu_custom_call.1} parent=1 // loop_pre_header
      _
    $region3: #{tpu_custom_call.1} parent=1 // loop_header
      %s19 = sphi 0, %s23
      %p20 = scmp.ge.s32.totalorder %s19, 4
      %s26 = sphi 0, %s38
      %s27 = sphi 0, %s34
      %s28 = sphi 0, %s26
      %s29 = sphi 0, %s27
      %s30 = sphi 0, %s28
      %s31 = sphi 0, %s29
      %s43 = sphi 0, %s45
      %s46 = sphi 0, %s43
      %s47 = sphi 0, %s46
      %s63 = sphi 0, %s47
      %s71 = sphi 0, %s73
      %s74 = sphi 0, %s71
      %s75 = sphi 0, %s74
      %s91 = sphi 0, %s75
      %s99 = sphi 0, %s101
      %s102 = sphi 0, %s99
      %s103 = sphi 0, %s102
      %s119 = sphi 0, %s103
      %s125 = sphi 0, %s127
      %s128 = sphi 0, %s125
      %s129 = sphi 0, %s128
      %s145 = sphi 0, %s129
      %s149 = sphi 0, %s149
      %s151 = sphi 0, %s149
      %s152 = sphi 0, %s151
      %s166 = sphi 0, %s152
      %s170 = sphi 0, %s170
      %s172 = sphi 0, %s170
      %s173 = sphi 0, %s172
      %s187 = sphi 0, %s173
      %s191 = sphi 0, %s191
      %s193 = sphi 0, %s191
      %s194 = sphi 0, %s193
      %s208 = sphi 0, %s194
      %s212 = sphi 0, %s212
      %s214 = sphi 0, %s212
      %s215 = sphi 0, %s214
      %s229 = sphi 0, %s215
      %s237 = sphi 0, %s239
      %s240 = sphi 0, %s237
      %s241 = sphi 0, %s240
      %s257 = sphi 0, %s241
      %s265 = sphi 0, %s267
      %s268 = sphi 0, %s265
      %s269 = sphi 0, %s268
      %s285 = sphi 0, %s269
    $region4: #{tpu_custom_call.1} parent=1 // loop_header_branch
      %22 = sbr.rel (%p20) target = $region8
    $region5: #{tpu_custom_call.1} parent=1 // loop_body
      %s24 = ssub.s32 %s19, 1
      %s25 = ssub.s32 %s19, 2
      %s32 = sadd.s32 1, %s27
      %p33 = scmp.ge.s32.totalorder %s32, 1
      %s34 = scalar_select %p33, 0, %s32
      %s35 = sadd.s32 1, %s26
      %s36 = scalar_select %p33, %s35, %s26
      %p37 = scmp.ge.s32.totalorder %s36, 2
      %s38 = scalar_select %p37, 0, %s36
      %s39 = ssub.s32 %s26, %s38
      %s40 = ssub.s32 %s27, %s34
      %s41 = sor.u32 %s39, %s40
      %p42 = scmp.eq.s32.totalorder %s41, 0
      %s44 = sadd.s32 %s43, 1
      %s45 = scalar_select %p42, %s43, %s44
      %p48 = pneg %p42
      %p49 = scmp.eq.s32.totalorder %s19, 1
      %p50 = por %p48, %p49
      %p51 = scmp.ne.s32.totalorder %s43, %s46
      %p52 = scmp.eq.s32.totalorder %s19, 0
      %p53 = por %p51, %p52
      %p54 = scmp.ne.s32.totalorder %s43, %s46
      %p55 = scmp.eq.s32.totalorder %s24, 1
      %p56 = por %p54, %p55
      %p57 = scmp.ne.s32.totalorder %s46, %s47
      %p58 = scmp.eq.s32.totalorder %s24, 0
      %p59 = por %p57, %p58
      %p60 = scmp.ne.s32.totalorder %s46, %s47
      %p61 = scmp.eq.s32.totalorder %s25, 1
      %p62 = por %p60, %p61
      %p64 = scmp.ne.s32.totalorder %s47, %s63
      %p65 = scmp.eq.s32.totalorder %s25, 0
      %p66 = por %p64, %p65
      %s67 = ssub.s32 %s26, %s38
      %s68 = ssub.s32 %s27, %s34
      %s69 = sor.u32 %s67, %s68
      %p70 = scmp.eq.s32.totalorder %s69, 0
      %s72 = sadd.s32 %s71, 1
      %s73 = scalar_select %p70, %s71, %s72
      %p76 = pneg %p70
      %p77 = scmp.eq.s32.totalorder %s19, 1
      %p78 = por %p76, %p77
      %p79 = scmp.ne.s32.totalorder %s71, %s74
      %p80 = scmp.eq.s32.totalorder %s19, 0
      %p81 = por %p79, %p80
      %p82 = scmp.ne.s32.totalorder %s71, %s74
      %p83 = scmp.eq.s32.totalorder %s24, 1
      %p84 = por %p82, %p83
      %p85 = scmp.ne.s32.totalorder %s74, %s75
      %p86 = scmp.eq.s32.totalorder %s24, 0
      %p87 = por %p85, %p86
      %p88 = scmp.ne.s32.totalorder %s74, %s75
      %p89 = scmp.eq.s32.totalorder %s25, 1
      %p90 = por %p88, %p89
      %p92 = scmp.ne.s32.totalorder %s75, %s91
      %p93 = scmp.eq.s32.totalorder %s25, 0
      %p94 = por %p92, %p93
      %s95 = ssub.s32 %s26, %s38
      %s96 = ssub.s32 %s27, %s34
      %s97 = sor.u32 %s95, %s96
      %p98 = scmp.eq.s32.totalorder %s97, 0
      %s100 = sadd.s32 %s99, 1
      %s101 = scalar_select %p98, %s99, %s100
      %p104 = pneg %p98
      %p105 = scmp.eq.s32.totalorder %s19, 1
      %p106 = por %p104, %p105
      %p107 = scmp.ne.s32.totalorder %s99, %s102
      %p108 = scmp.eq.s32.totalorder %s19, 0
      %p109 = por %p107, %p108
      %p110 = scmp.ne.s32.totalorder %s99, %s102
      %p111 = scmp.eq.s32.totalorder %s24, 1
      %p112 = por %p110, %p111
      %p113 = scmp.ne.s32.totalorder %s102, %s103
      %p114 = scmp.eq.s32.totalorder %s24, 0
      %p115 = por %p113, %p114
      %p116 = scmp.ne.s32.totalorder %s102, %s103
      %p117 = scmp.eq.s32.totalorder %s25, 1
      %p118 = por %p116, %p117
      %p120 = scmp.ne.s32.totalorder %s103, %s119
      %p121 = scmp.eq.s32.totalorder %s25, 0
      %p122 = por %p120, %p121
      %s123 = ssub.s32 %s26, %s38
      %p124 = scmp.eq.s32.totalorder %s123, 0
      %s126 = sadd.s32 %s125, 1
      %s127 = scalar_select %p124, %s125, %s126
      %p130 = pneg %p124
      %p131 = scmp.eq.s32.totalorder %s19, 1
      %p132 = por %p130, %p131
      %p133 = scmp.ne.s32.totalorder %s125, %s128
      %p134 = scmp.eq.s32.totalorder %s19, 0
      %p135 = por %p133, %p134
      %p136 = scmp.ne.s32.totalorder %s125, %s128
      %p137 = scmp.eq.s32.totalorder %s24, 1
      %p138 = por %p136, %p137
      %p139 = scmp.ne.s32.totalorder %s128, %s129
      %p140 = scmp.eq.s32.totalorder %s24, 0
      %p141 = por %p139, %p140
      %p142 = scmp.ne.s32.totalorder %s128, %s129
      %p143 = scmp.eq.s32.totalorder %s25, 1
      %p144 = por %p142, %p143
      %p146 = scmp.ne.s32.totalorder %s129, %s145
      %p147 = scmp.eq.s32.totalorder %s25, 0
      %p148 = por %p146, %p147
      %s150 = sadd.s32 %s149, 1
      %p153 = scmp.eq.s32.totalorder %s19, 1
      %p154 = scmp.ne.s32.totalorder %s149, %s151
      %p155 = scmp.eq.s32.totalorder %s19, 0
      %p156 = por %p154, %p155
      %p157 = scmp.ne.s32.totalorder %s149, %s151
      %p158 = scmp.eq.s32.totalorder %s24, 1
      %p159 = por %p157, %p158
      %p160 = scmp.ne.s32.totalorder %s151, %s152
      %p161 = scmp.eq.s32.totalorder %s24, 0
      %p162 = por %p160, %p161
      %p163 = scmp.ne.s32.totalorder %s151, %s152
      %p164 = scmp.eq.s32.totalorder %s25, 1
      %p165 = por %p163, %p164
      %p167 = scmp.ne.s32.totalorder %s152, %s166
      %p168 = scmp.eq.s32.totalorder %s25, 0
      %p169 = por %p167, %p168
      %s171 = sadd.s32 %s170, 1
      %p174 = scmp.eq.s32.totalorder %s19, 1
      %p175 = scmp.ne.s32.totalorder %s170, %s172
      %p176 = scmp.eq.s32.totalorder %s19, 0
      %p177 = por %p175, %p176
      %p178 = scmp.ne.s32.totalorder %s170, %s172
      %p179 = scmp.eq.s32.totalorder %s24, 1
      %p180 = por %p178, %p179
      %p181 = scmp.ne.s32.totalorder %s172, %s173
      %p182 = scmp.eq.s32.totalorder %s24, 0
      %p183 = por %p181, %p182
      %p184 = scmp.ne.s32.totalorder %s172, %s173
      %p185 = scmp.eq.s32.totalorder %s25, 1
      %p186 = por %p184, %p185
      %p188 = scmp.ne.s32.totalorder %s173, %s187
      %p189 = scmp.eq.s32.totalorder %s25, 0
      %p190 = por %p188, %p189
      %s192 = sadd.s32 %s191, 1
      %p195 = scmp.eq.s32.totalorder %s19, 1
      %p196 = scmp.ne.s32.totalorder %s191, %s193
      %p197 = scmp.eq.s32.totalorder %s19, 0
      %p198 = por %p196, %p197
      %p199 = scmp.ne.s32.totalorder %s191, %s193
      %p200 = scmp.eq.s32.totalorder %s24, 1
      %p201 = por %p199, %p200
      %p202 = scmp.ne.s32.totalorder %s193, %s194
      %p203 = scmp.eq.s32.totalorder %s24, 0
      %p204 = por %p202, %p203
      %p205 = scmp.ne.s32.totalorder %s193, %s194
      %p206 = scmp.eq.s32.totalorder %s25, 1
      %p207 = por %p205, %p206
      %p209 = scmp.ne.s32.totalorder %s194, %s208
      %p210 = scmp.eq.s32.totalorder %s25, 0
      %p211 = por %p209, %p210
      %s213 = sadd.s32 %s212, 1
      %p216 = scmp.eq.s32.totalorder %s19, 1
      %p217 = scmp.ne.s32.totalorder %s212, %s214
      %p218 = scmp.eq.s32.totalorder %s19, 0
      %p219 = por %p217, %p218
      %p220 = scmp.ne.s32.totalorder %s212, %s214
      %p221 = scmp.eq.s32.totalorder %s24, 1
      %p222 = por %p220, %p221
      %p223 = scmp.ne.s32.totalorder %s214, %s215
      %p224 = scmp.eq.s32.totalorder %s24, 0
      %p225 = por %p223, %p224
      %p226 = scmp.ne.s32.totalorder %s214, %s215
      %p227 = scmp.eq.s32.totalorder %s25, 1
      %p228 = por %p226, %p227
      %p230 = scmp.ne.s32.totalorder %s215, %s229
      %p231 = scmp.eq.s32.totalorder %s25, 0
      %p232 = por %p230, %p231
      %s233 = ssub.s32 %s26, %s38
      %s234 = ssub.s32 %s27, %s34
      %s235 = sor.u32 %s233, %s234
      %p236 = scmp.eq.s32.totalorder %s235, 0
      %s238 = sadd.s32 %s237, 1
      %s239 = scalar_select %p236, %s237, %s238
      %p242 = pneg %p236
      %p243 = scmp.eq.s32.totalorder %s19, 1
      %p244 = por %p242, %p243
      %p245 = scmp.ne.s32.totalorder %s237, %s240
      %p246 = scmp.eq.s32.totalorder %s19, 0
      %p247 = por %p245, %p246
      %p248 = scmp.ne.s32.totalorder %s237, %s240
      %p249 = scmp.eq.s32.totalorder %s24, 1
      %p250 = por %p248, %p249
      %p251 = scmp.ne.s32.totalorder %s240, %s241
      %p252 = scmp.eq.s32.totalorder %s24, 0
      %p253 = por %p251, %p252
      %p254 = scmp.ne.s32.totalorder %s240, %s241
      %p255 = scmp.eq.s32.totalorder %s25, 1
      %p256 = por %p254, %p255
      %p258 = scmp.ne.s32.totalorder %s241, %s257
      %p259 = scmp.eq.s32.totalorder %s25, 0
      %p260 = por %p258, %p259
      %s261 = ssub.s32 %s26, %s38
      %s262 = ssub.s32 %s27, %s34
      %s263 = sor.u32 %s261, %s262
      %p264 = scmp.eq.s32.totalorder %s263, 0
      %s266 = sadd.s32 %s265, 1
      %s267 = scalar_select %p264, %s265, %s266
      %p270 = pneg %p264
      %p271 = scmp.eq.s32.totalorder %s19, 1
      %p272 = por %p270, %p271
      %p273 = scmp.ne.s32.totalorder %s265, %s268
      %p274 = scmp.eq.s32.totalorder %s19, 0
      %p275 = por %p273, %p274
      %p276 = scmp.ne.s32.totalorder %s265, %s268
      %p277 = scmp.eq.s32.totalorder %s24, 1
      %p278 = por %p276, %p277
      %p279 = scmp.ne.s32.totalorder %s268, %s269
      %p280 = scmp.eq.s32.totalorder %s24, 0
      %p281 = por %p279, %p280
      %p282 = scmp.ne.s32.totalorder %s268, %s269
      %p283 = scmp.eq.s32.totalorder %s25, 1
      %p284 = por %p282, %p283
      %p286 = scmp.ne.s32.totalorder %s269, %s285
      %p287 = scmp.eq.s32.totalorder %s25, 0
      %p288 = por %p286, %p287
      %p289 = scmp.le.s32.totalorder 1, %s19
      %p290 = scmp.lt.s32.totalorder %s19, 3
      %p291 = pnand %p289, %p290
      %p292 = pneg %p291
      // Predicated region
      $region9: #{tpu_custom_call.1} parent=5 // pred_check
        _
      $region10: #{tpu_custom_call.1} parent=5 // pred_check_branch
        %294 = sbr.rel (%p291) target = $region12
      $region11: #{tpu_custom_call.1} parent=5 // pred_region
        %s295 = ssub.s32 %s19, 1
        // Predicated region
        $region13: #{tpu_custom_call.1} parent=11 // pred_check
          %p296 = pneg %p162
        $region14: #{tpu_custom_call.1} parent=11 // pred_check_branch
          %298 = sbr.rel (%p296) target = $region16
        $region15: #{tpu_custom_call.1} parent=11 // pred_region
          _
        $region16: #{tpu_custom_call.1} parent=11 // pred_fallthru
          _
        // Predicated region
        $region17: #{tpu_custom_call.1} parent=11 // pred_check
          %p299 = pneg %p183
        $region18: #{tpu_custom_call.1} parent=11 // pred_check_branch
          %301 = sbr.rel (%p299) target = $region20
        $region19: #{tpu_custom_call.1} parent=11 // pred_region
          _
        $region20: #{tpu_custom_call.1} parent=11 // pred_fallthru
          _
        // Predicated region
        $region21: #{tpu_custom_call.1} parent=11 // pred_check
          %p302 = pneg %p204
        $region22: #{tpu_custom_call.1} parent=11 // pred_check_branch
          %304 = sbr.rel (%p302) target = $region24
        $region23: #{tpu_custom_call.1} parent=11 // pred_region
          _
        $region24: #{tpu_custom_call.1} parent=11 // pred_fallthru
          _
        // Predicated region
        $region25: #{tpu_custom_call.1} parent=11 // pred_check
          %p305 = pneg %p225
        $region26: #{tpu_custom_call.1} parent=11 // pred_check_branch
          %307 = sbr.rel (%p305) target = $region28
        $region27: #{tpu_custom_call.1} parent=11 // pred_region
          _
        $region28: #{tpu_custom_call.1} parent=11 // pred_fallthru
          _
      $region12: #{tpu_custom_call.1} parent=5 // pred_fallthru
        _
      %p308 = scmp.lt.s32.totalorder %s19, 2
      // Predicated region
      $region29: #{tpu_custom_call.1} parent=5 // pred_check
        %p309 = pneg %p308
      $region30: #{tpu_custom_call.1} parent=5 // pred_check_branch
        %311 = sbr.rel (%p309) target = $region32
      $region31: #{tpu_custom_call.1} parent=5 // pred_region
        // Predicated region
        $region33: #{tpu_custom_call.1} parent=31 // pred_check
          %p312 = pneg %p53
        $region34: #{tpu_custom_call.1} parent=31 // pred_check_branch
          %314 = sbr.rel (%p312) target = $region36
        $region35: #{tpu_custom_call.1} parent=31 // pred_region
          %p315 = scmp.lt.s32.totalorder %s26, 1
          %s316 = scalar_select %p315, %s26, 1
          %p317 = scmp.lt.s32.totalorder %s27, 0
          %s318 = scalar_select %p317, %s27, 0
          %s319 = smul.addr %s316, 4
          %s320 = sadd.s32 %s318, %s319
          %s321 = smul.addr %s320, 8
          %s322 = scalar_lea.vmem %s0, %s321
        $region36: #{tpu_custom_call.1} parent=31 // pred_fallthru
          _
        // Predicated region
        $region37: #{tpu_custom_call.1} parent=31 // pred_check
          %p323 = pneg %p81
        $region38: #{tpu_custom_call.1} parent=31 // pred_check_branch
          %325 = sbr.rel (%p323) target = $region40
        $region39: #{tpu_custom_call.1} parent=31 // pred_region
          %p326 = scmp.lt.s32.totalorder %s26, 1
          %s327 = scalar_select %p326, %s26, 1
          %p328 = scmp.lt.s32.totalorder %s27, 0
          %s329 = scalar_select %p328, %s27, 0
          %s330 = smul.addr %s327, 4
          %s331 = sadd.s32 %s329, %s330
          %s332 = smul.addr %s331, 8
          %s333 = scalar_lea.vmem %s1, %s332
        $region40: #{tpu_custom_call.1} parent=31 // pred_fallthru
          _
        // Predicated region
        $region41: #{tpu_custom_call.1} parent=31 // pred_check
          %p334 = pneg %p109
        $region42: #{tpu_custom_call.1} parent=31 // pred_check_branch
          %336 = sbr.rel (%p334) target = $region44
        $region43: #{tpu_custom_call.1} parent=31 // pred_region
          %p337 = scmp.lt.s32.totalorder %s26, 1
          %s338 = scalar_select %p337, %s26, 1
          %p339 = scmp.lt.s32.totalorder %s27, 0
          %s340 = scalar_select %p339, %s27, 0
          %s341 = smul.addr %s338, 4
          %s342 = sadd.s32 %s340, %s341
          %s343 = smul.addr %s342, 8
          %s344 = scalar_lea.vmem %s2, %s343
        $region44: #{tpu_custom_call.1} parent=31 // pred_fallthru
          _
        // Predicated region
        $region45: #{tpu_custom_call.1} parent=31 // pred_check
          %p345 = pneg %p135
        $region46: #{tpu_custom_call.1} parent=31 // pred_check_branch
          %347 = sbr.rel (%p345) target = $region48
        $region47: #{tpu_custom_call.1} parent=31 // pred_region
          %p348 = scmp.lt.s32.totalorder %s26, 1
          %s349 = scalar_select %p348, %s26, 1
          %s350 = smul.addr %s349, 4
          %s351 = smul.addr %s350, 8
          %s352 = scalar_lea.vmem %s3, %s351
        $region48: #{tpu_custom_call.1} parent=31 // pred_fallthru
          _
      $region32: #{tpu_custom_call.1} parent=5 // pred_fallthru
        _
      %p353 = scmp.le.s32.totalorder 1, %s19
      %p354 = scmp.lt.s32.totalorder %s19, 3
      %p355 = pnand %p353, %p354
      %p356 = pneg %p355
      // Predicated region
      $region49: #{tpu_custom_call.1} parent=5 // pred_check
        _
      $region50: #{tpu_custom_call.1} parent=5 // pred_check_branch
        %358 = sbr.rel (%p355) target = $region52
      $region51: #{tpu_custom_call.1} parent=5 // pred_region
        %s359 = ssub.s32 %s19, 1
        %p360 = scmp.lt.s32.totalorder %s28, 1
        %s361 = scalar_select %p360, %s28, 1
        %p362 = scmp.lt.s32.totalorder %s29, 0
        %s363 = scalar_select %p362, %s29, 0
        %s364 = smul.addr %s361, 4
        %s365 = sadd.s32 %s363, %s364
        %s366 = smul.addr %s365, 8
        %s367 = scalar_lea.vmem %s0, %s366
        %p368 = pneg %p59
        %p369 = pneg %p56
        %p370 = scmp.lt.s32.totalorder %s28, 1
        %s371 = scalar_select %p370, %s28, 1
        %p372 = scmp.lt.s32.totalorder %s29, 0
        %s373 = scalar_select %p372, %s29, 0
        %s374 = smul.addr %s371, 4
        %s375 = sadd.s32 %s373, %s374
        %s376 = smul.addr %s375, 8
        %s377 = scalar_lea.vmem %s1, %s376
        %p378 = pneg %p87
        %p379 = pneg %p84
        %p380 = scmp.lt.s32.totalorder %s28, 1
        %s381 = scalar_select %p380, %s28, 1
        %p382 = scmp.lt.s32.totalorder %s29, 0
        %s383 = scalar_select %p382, %s29, 0
        %s384 = smul.addr %s381, 4
        %s385 = sadd.s32 %s383, %s384
        %s386 = smul.addr %s385, 8
        %s387 = scalar_lea.vmem %s2, %s386
        %p388 = pneg %p115
        %p389 = pneg %p112
        %p390 = scmp.lt.s32.totalorder %s28, 1
        %s391 = scalar_select %p390, %s28, 1
        %s392 = smul.addr %s391, 4
        %s393 = smul.addr %s392, 8
        %s394 = scalar_lea.vmem %s3, %s393
        %p395 = pneg %p141
        %p396 = pneg %p138
        %p397 = pneg %p162
        %p398 = pneg %p159
        %p399 = pneg %p183
        %p400 = pneg %p180
        %p401 = pneg %p204
        %p402 = pneg %p201
        %p403 = pneg %p225
        %p404 = pneg %p222
        %p405 = pneg %p253
        %p406 = pneg %p250
        %p407 = scmp.lt.s32.totalorder %s28, 1
        %s408 = scalar_select %p407, %s28, 1
        %p409 = scmp.lt.s32.totalorder %s29, 0
        %s410 = scalar_select %p409, %s29, 0
        %s411 = smul.addr %s408, 4
        %s412 = sadd.s32 %s410, %s411
        %s413 = smul.addr %s412, 8
        %s414 = scalar_lea.vmem %s8, %s413
        %p415 = pneg %p281
        %p416 = pneg %p278
        %s417 = sand.u32 %s268, 1
        %s418 = scalar_lea.sflag [#allocation3], %s417
        %s419 = sand.u32 %s268, 1
        %s420 = scalar_lea.vmem [#allocation2], %s419
        %p421 = scmp.lt.s32.totalorder %s28, 1
        %s422 = scalar_select %p421, %s28, 1
        %p423 = scmp.lt.s32.totalorder %s29, 0
        %s424 = scalar_select %p423, %s29, 0
        %s425 = smul.addr %s422, 4
        %s426 = sadd.s32 %s424, %s425
        %s427 = smul.addr %s426, 8
        %s428 = scalar_lea.vmem %s0, %s427
        %p429 = scmp.lt.s32.totalorder %s28, 1
        %s430 = scalar_select %p429, %s28, 1
        %p431 = scmp.lt.s32.totalorder %s29, 0
        %s432 = scalar_select %p431, %s29, 0
        %s433 = smul.addr %s430, 4
        %s434 = sadd.s32 %s432, %s433
        %s435 = smul.addr %s434, 8
        %s436 = scalar_lea.vmem %s1, %s435
        %p437 = scmp.lt.s32.totalorder %s28, 1
        %s438 = scalar_select %p437, %s28, 1
        %p439 = scmp.lt.s32.totalorder %s29, 0
        %s440 = scalar_select %p439, %s29, 0
        %s441 = smul.addr %s438, 4
        %s442 = sadd.s32 %s440, %s441
        %s443 = smul.addr %s442, 8
        %s444 = scalar_lea.vmem %s2, %s443
        %p445 = scmp.lt.s32.totalorder %s28, 1
        %s446 = scalar_select %p445, %s28, 1
        %s447 = smul.addr %s446, 4
        %s448 = smul.addr %s447, 8
        %s449 = scalar_lea.vmem %s3, %s448
        %p450 = scmp.lt.s32.totalorder %s28, 1
        %s451 = scalar_select %p450, %s28, 1
        %p452 = scmp.lt.s32.totalorder %s29, 0
        %s453 = scalar_select %p452, %s29, 0
        %s454 = smul.addr %s451, 4
        %s455 = sadd.s32 %s453, %s454
        %s456 = smul.addr %s455, 8
        %s457 = scalar_lea.vmem %s8, %s456
        %v458 = vld [vmem:[%s428] sm:$0xff]
        %v459 = vld [vmem:[%s428 + $0x8] sm:$0xff]
        %v460 = vld [vmem:[%s428 + $0x10] sm:$0xff]
        %v461 = vld [vmem:[%s428 + $0x18] sm:$0xff]
        %v462 = vld [vmem:[%s436] sm:$0xff]
        %v463 = vld [vmem:[%s436 + $0x8] sm:$0xff]
        %v464 = vld [vmem:[%s436 + $0x10] sm:$0xff]
        %v465 = vld [vmem:[%s436 + $0x18] sm:$0xff]
        %v466 = vld [vmem:[%s444] sm:$0xff]
        %v467 = vld [vmem:[%s444 + $0x8] sm:$0xff]
        %v468 = vld [vmem:[%s444 + $0x10] sm:$0xff]
        %v469 = vld [vmem:[%s444 + $0x18] sm:$0xff]
        %v470 = vld [vmem:[%s4] sm:$0xff]
        %v471 = vld [vmem:[%s4 + $0x8] sm:$0xff]
        %v472 = vld [vmem:[%s4 + $0x10] sm:$0xff]
        %v473 = vld [vmem:[%s4 + $0x18] sm:$0xff]
        %v474 = vld [vmem:[%s5] sm:$0xff]
        %v475 = vld [vmem:[%s5 + $0x8] sm:$0xff]
        %v476 = vld [vmem:[%s5 + $0x10] sm:$0xff]
        %v477 = vld [vmem:[%s5 + $0x18] sm:$0xff]
        %479 = vset.pattern.permute.xlu0 0
        %480 = vperm.xlu0 %479, %v474
        %v481 = vpop.permute.xlu0 %480
        %484 = vset.pattern.permute.xlu0 0
        %485 = vperm.xlu0 %484, %v475
        %v486 = vpop.permute.xlu0 %485
        %489 = vset.pattern.permute.xlu0 0
        %490 = vperm.xlu0 %489, %v476
        %v491 = vpop.permute.xlu0 %490
        %494 = vset.pattern.permute.xlu0 0
        %495 = vperm.xlu0 %494, %v477
        %v496 = vpop.permute.xlu0 %495
        %vm498 = vcmask 523264
        %v500 = vsel %vm498, %v470, 0
        %v503 = vsel %vm498, %v471, 0
        %v506 = vsel %vm498, %v472, 0
        %v509 = vsel %vm498, %v473, 0
        %511 = vmatprep.subr.mxu0 0.0
        %512 = vmatpush1.msra.mxu0 %v458
        %513 = vmatprep.subr.mxu0 0.0
        %514 = vmatpush1.msra.mxu0 %v459
        %515 = vmatprep.subr.mxu0 0.0
        %516 = vmatpush1.msra.mxu0 %v460
        %517 = vmatprep.subr.mxu0 0.0
        %518 = vmatpush1.msra.mxu0 %v461
        %519 = vmatprep.subr.mxu0 0.0
        %520 = vmatpush1.msra.mxu0 %v462
        %521 = vmatprep.subr.mxu0 0.0
        %522 = vmatpush1.msra.mxu0 %v463
        %523 = vmatprep.subr.mxu0 0.0
        %524 = vmatpush1.msra.mxu0 %v464
        %525 = vmatprep.subr.mxu0 0.0
        %526 = vmatpush1.msra.mxu0 %v465
        %527 = vmatprep.subr.mxu0 0.0
        %528 = vmatpush1.msra.mxu0 0.0
        %529 = vmatprep.subr.mxu0 0.0
        %530 = vmatpush1.msra.mxu0 0.0
        %531 = vmatprep.subr.mxu0 0.0
        %532 = vmatpush1.msra.mxu0 0.0
        %533 = vmatprep.subr.mxu0 0.0
        %534 = vmatpush1.msra.mxu0 0.0
        %535 = vmatprep.subr.mxu0 0.0
        %536 = vmatpush1.msra.mxu0 0.0
        %537 = vmatprep.subr.mxu0 0.0
        %538 = vmatpush1.msra.mxu0 0.0
        %539 = vmatprep.subr.mxu0 0.0
        %540 = vmatpush1.msra.mxu0 0.0
        %541 = vmatprep.subr.mxu0 0.0
        %542 = vmatpush1.msra.mxu0 0.0
        %543 = vmatprep.subr.mxu0 0.0
        %544 = vmatpush1.msra.mxu0 0.0
        %545 = vmatprep.subr.mxu0 0.0
        %546 = vmatpush1.msra.mxu0 0.0
        %547 = vmatprep.subr.mxu0 0.0
        %548 = vmatpush1.msra.mxu0 0.0
        %549 = vmatprep.subr.mxu0 0.0
        %550 = vmatpush1.msra.mxu0 0.0
        %551 = vmatprep.subr.mxu0 0.0
        %552 = vmatpush1.msra.mxu0 0.0
        %553 = vmatprep.subr.mxu0 0.0
        %554 = vmatpush1.msra.mxu0 0.0
        %555 = vmatprep.subr.mxu0 0.0
        %556 = vmatpush1.msra.mxu0 0.0
        %557 = vmatprep.subr.mxu0 0.0
        %558 = vmatpush1.msra.mxu0 0.0
        %559 = vmatprep.subr.mxu0 0.0
        %560 = vmatpush1.msra.mxu0 0.0
        %561 = vmatprep.subr.mxu0 0.0
        %562 = vmatpush1.msra.mxu0 0.0
        %563 = vmatprep.subr.mxu0 0.0
        %564 = vmatpush1.msra.mxu0 0.0
        %565 = vmatprep.subr.mxu0 0.0
        %566 = vmatpush1.msra.mxu0 0.0
        %567 = vmatprep.subr.mxu0 0.0
        %568 = vmatpush1.msra.mxu0 0.0
        %569 = vmatprep.subr.mxu0 0.0
        %570 = vmatpush1.msra.mxu0 0.0
        %571 = vmatprep.subr.mxu0 0.0
        %572 = vmatpush1.msra.mxu0 0.0
        %573 = vmatprep.subr.mxu0 0.0
        %574 = vmatpush1.msra.mxu0 0.0
        %575 = vmatprep.mubr.f32.mxu0 0.0
        %576 = vmatmul.mubr.f32.gmra.mrb[0].mxu0 %v500
        %v577 = vpop.f32.mrb[0].mxu0
        %v578 = vadd.f32 %v481, %v577
        %v579 = vpop.f32.mrb[0].mxu0
        %580 = vmatprep.mubr.f32.mxu0 0.0
        %581 = vmatmul.mubr.f32.gmra.mrb[0].mxu0 %v503
        %v582 = vpop.f32.mrb[0].mxu0
        %v583 = vadd.f32 %v486, %v582
        %v584 = vpop.f32.mrb[0].mxu0
        %585 = vmatprep.mubr.f32.mxu0 0.0
        %586 = vmatmul.mubr.f32.gmra.mrb[0].mxu0 %v506
        %v587 = vpop.f32.mrb[0].mxu0
        %v588 = vadd.f32 %v491, %v587
        %v589 = vpop.f32.mrb[0].mxu0
        %590 = vmatprep.mubr.f32.mxu0 0.0
        %591 = vmatmul.mubr.f32.gmra.mrb[0].mxu0 %v509
        %v592 = vpop.f32.mrb[0].mxu0
        %v593 = vadd.f32 %v496, %v592
        %v594 = vpop.f32.mrb[0].mxu0
        %595 = vdwg.mxu0
        %vm596 = vcmask 64512
        %597 = vst.msk [vmem:[%s457] sm:$0xff] %vm596, %v578
        %598 = vst.msk [vmem:[%s457 + $0x8] sm:$0xff] %vm596, %v583
        %599 = vst.msk [vmem:[%s457 + $0x10] sm:$0xff] %vm596, %v588
        %600 = vst.msk [vmem:[%s457 + $0x18] sm:$0xff] %vm596, %v593
        %v601 = vld [vmem:[%s6] sm:$0xff]
        %v602 = vld [vmem:[%s6 + $0x8] sm:$0xff]
        %v603 = vld [vmem:[%s6 + $0x10] sm:$0xff]
        %v604 = vld [vmem:[%s6 + $0x18] sm:$0xff]
        %v605 = vld [vmem:[%s449] sm:$0xff]
        %v606 = vld [vmem:[%s449 + $0x8] sm:$0xff]
        %v607 = vld [vmem:[%s449 + $0x10] sm:$0xff]
        %v608 = vld [vmem:[%s449 + $0x18] sm:$0xff]
        %610 = vset.pattern.permute.xlu0 0
        %611 = vperm.xlu0 %610, %v605
        %v612 = vpop.permute.xlu0 %611
        %615 = vset.pattern.permute.xlu0 0
        %616 = vperm.xlu0 %615, %v606
        %v617 = vpop.permute.xlu0 %616
        %620 = vset.pattern.permute.xlu0 0
        %621 = vperm.xlu0 %620, %v607
        %v622 = vpop.permute.xlu0 %621
        %625 = vset.pattern.permute.xlu0 0
        %626 = vperm.xlu0 %625, %v608
        %v627 = vpop.permute.xlu0 %626
        %vm629 = vcmask 261120
        %v631 = vsel %vm629, %v601, 0
        %v634 = vsel %vm629, %v602, 0
        %v637 = vsel %vm629, %v603, 0
        %v640 = vsel %vm629, %v604, 0
        %642 = vmatprep.subr.mxu0 0.0
        %643 = vmatpush1.msra.mxu0 %v466
        %644 = vmatprep.subr.mxu0 0.0
        %645 = vmatpush1.msra.mxu0 %v467
        %646 = vmatprep.subr.mxu0 0.0
        %647 = vmatpush1.msra.mxu0 %v468
        %648 = vmatprep.subr.mxu0 0.0
        %649 = vmatpush1.msra.mxu0 %v469
        %650 = vmatprep.subr.mxu0 0.0
        %651 = vmatpush1.msra.mxu0 0.0
        %652 = vmatprep.subr.mxu0 0.0
        %653 = vmatpush1.msra.mxu0 0.0
        %654 = vmatprep.subr.mxu0 0.0
        %655 = vmatpush1.msra.mxu0 0.0
        %656 = vmatprep.subr.mxu0 0.0
        %657 = vmatpush1.msra.mxu0 0.0
        %658 = vmatprep.subr.mxu0 0.0
        %659 = vmatpush1.msra.mxu0 0.0
        %660 = vmatprep.subr.mxu0 0.0
        %661 = vmatpush1.msra.mxu0 0.0
        %662 = vmatprep.subr.mxu0 0.0
        %663 = vmatpush1.msra.mxu0 0.0
        %664 = vmatprep.subr.mxu0 0.0
        %665 = vmatpush1.msra.mxu0 0.0
        %666 = vmatprep.subr.mxu0 0.0
        %667 = vmatpush1.msra.mxu0 0.0
        %668 = vmatprep.subr.mxu0 0.0
        %669 = vmatpush1.msra.mxu0 0.0
        %670 = vmatprep.subr.mxu0 0.0
        %671 = vmatpush1.msra.mxu0 0.0
        %672 = vmatprep.subr.mxu0 0.0
        %673 = vmatpush1.msra.mxu0 0.0
        %674 = vmatprep.subr.mxu0 0.0
        %675 = vmatpush1.msra.mxu0 0.0
        %676 = vmatprep.subr.mxu0 0.0
        %677 = vmatpush1.msra.mxu0 0.0
        %678 = vmatprep.subr.mxu0 0.0
        %679 = vmatpush1.msra.mxu0 0.0
        %680 = vmatprep.subr.mxu0 0.0
        %681 = vmatpush1.msra.mxu0 0.0
        %682 = vmatprep.subr.mxu0 0.0
        %683 = vmatpush1.msra.mxu0 0.0
        %684 = vmatprep.subr.mxu0 0.0
        %685 = vmatpush1.msra.mxu0 0.0
        %686 = vmatprep.subr.mxu0 0.0
        %687 = vmatpush1.msra.mxu0 0.0
        %688 = vmatprep.subr.mxu0 0.0
        %689 = vmatpush1.msra.mxu0 0.0
        %690 = vmatprep.subr.mxu0 0.0
        %691 = vmatpush1.msra.mxu0 0.0
        %692 = vmatprep.subr.mxu0 0.0
        %693 = vmatpush1.msra.mxu0 0.0
        %694 = vmatprep.subr.mxu0 0.0
        %695 = vmatpush1.msra.mxu0 0.0
        %696 = vmatprep.subr.mxu0 0.0
        %697 = vmatpush1.msra.mxu0 0.0
        %698 = vmatprep.subr.mxu0 0.0
        %699 = vmatpush1.msra.mxu0 0.0
        %700 = vmatprep.subr.mxu0 0.0
        %701 = vmatpush1.msra.mxu0 0.0
        %702 = vmatprep.subr.mxu0 0.0
        %703 = vmatpush1.msra.mxu0 0.0
        %704 = vmatprep.subr.mxu0 0.0
        %705 = vmatpush1.msra.mxu0 0.0
        %706 = vmatprep.mubr.f32.mxu0 0.0
        %707 = vmatmul.mubr.f32.gmra.mrb[0].mxu0 %v631
        %v708 = vpop.f32.mrb[0].mxu0
        %v709 = vadd.f32 %v612, %v708
        %v710 = vpop.f32.mrb[0].mxu0
        %711 = vmatprep.mubr.f32.mxu0 0.0
        %712 = vmatmul.mubr.f32.gmra.mrb[0].mxu0 %v634
        %v713 = vpop.f32.mrb[0].mxu0
        %v714 = vadd.f32 %v617, %v713
        %v715 = vpop.f32.mrb[0].mxu0
        %716 = vmatprep.mubr.f32.mxu0 0.0
        %717 = vmatmul.mubr.f32.gmra.mrb[0].mxu0 %v637
        %v718 = vpop.f32.mrb[0].mxu0
        %v719 = vadd.f32 %v622, %v718
        %v720 = vpop.f32.mrb[0].mxu0
        %721 = vmatprep.mubr.f32.mxu0 0.0
        %722 = vmatmul.mubr.f32.gmra.mrb[0].mxu0 %v640
        %v723 = vpop.f32.mrb[0].mxu0
        %v724 = vadd.f32 %v627, %v723
        %v725 = vpop.f32.mrb[0].mxu0
        %726 = vdwg.mxu0
        %v727 = vadd.f32 %v578, %v709
        %v728 = vadd.f32 %v583, %v714
        %v729 = vadd.f32 %v588, %v719
        %v730 = vadd.f32 %v593, %v724
        %v731 = vtanh.pop %v727
        %v732 = vtanh.pop %v728
        %v733 = vtanh.pop %v729
        %v734 = vtanh.pop %v730
        %v735 = vld [vmem:[%s7] sm:$0x1]
        %v737 = vsel %vm629, %v735, 0
        %739 = vmatprep.subr.mxu0 0.0
        %740 = vmatpush1.msra.mxu0 %v731
        %741 = vmatprep.subr.mxu0 0.0
        %742 = vmatpush1.msra.mxu0 %v732
        %743 = vmatprep.subr.mxu0 0.0
        %744 = vmatpush1.msra.mxu0 %v733
        %745 = vmatprep.subr.mxu0 0.0
        %746 = vmatpush1.msra.mxu0 %v734
        %747 = vmatprep.subr.mxu0 0.0
        %748 = vmatpush1.msra.mxu0 0.0
        %749 = vmatprep.subr.mxu0 0.0
        %750 = vmatpush1.msra.mxu0 0.0
        %751 = vmatprep.subr.mxu0 0.0
        %752 = vmatpush1.msra.mxu0 0.0
        %753 = vmatprep.subr.mxu0 0.0
        %754 = vmatpush1.msra.mxu0 0.0
        %755 = vmatprep.subr.mxu0 0.0
        %756 = vmatpush1.msra.mxu0 0.0
        %757 = vmatprep.subr.mxu0 0.0
        %758 = vmatpush1.msra.mxu0 0.0
        %759 = vmatprep.subr.mxu0 0.0
        %760 = vmatpush1.msra.mxu0 0.0
        %761 = vmatprep.subr.mxu0 0.0
        %762 = vmatpush1.msra.mxu0 0.0
        %763 = vmatprep.subr.mxu0 0.0
        %764 = vmatpush1.msra.mxu0 0.0
        %765 = vmatprep.subr.mxu0 0.0
        %766 = vmatpush1.msra.mxu0 0.0
        %767 = vmatprep.subr.mxu0 0.0
        %768 = vmatpush1.msra.mxu0 0.0
        %769 = vmatprep.subr.mxu0 0.0
        %770 = vmatpush1.msra.mxu0 0.0
        %771 = vmatprep.subr.mxu0 0.0
        %772 = vmatpush1.msra.mxu0 0.0
        %773 = vmatprep.subr.mxu0 0.0
        %774 = vmatpush1.msra.mxu0 0.0
        %775 = vmatprep.subr.mxu0 0.0
        %776 = vmatpush1.msra.mxu0 0.0
        %777 = vmatprep.subr.mxu0 0.0
        %778 = vmatpush1.msra.mxu0 0.0
        %779 = vmatprep.subr.mxu0 0.0
        %780 = vmatpush1.msra.mxu0 0.0
        %781 = vmatprep.subr.mxu0 0.0
        %782 = vmatpush1.msra.mxu0 0.0
        %783 = vmatprep.subr.mxu0 0.0
        %784 = vmatpush1.msra.mxu0 0.0
        %785 = vmatprep.subr.mxu0 0.0
        %786 = vmatpush1.msra.mxu0 0.0
        %787 = vmatprep.subr.mxu0 0.0
        %788 = vmatpush1.msra.mxu0 0.0
        %789 = vmatprep.subr.mxu0 0.0
        %790 = vmatpush1.msra.mxu0 0.0
        %791 = vmatprep.subr.mxu0 0.0
        %792 = vmatpush1.msra.mxu0 0.0
        %793 = vmatprep.subr.mxu0 0.0
        %794 = vmatpush1.msra.mxu0 0.0
        %795 = vmatprep.subr.mxu0 0.0
        %796 = vmatpush1.msra.mxu0 0.0
        %797 = vmatprep.subr.mxu0 0.0
        %798 = vmatpush1.msra.mxu0 0.0
        %799 = vmatprep.subr.mxu0 0.0
        %800 = vmatpush1.msra.mxu0 0.0
        %801 = vmatprep.subr.mxu0 0.0
        %802 = vmatpush1.msra.mxu0 0.0
        %803 = vmatprep.mubr.f32.mxu0 0.0
        %804 = vmatmul.mubr.f32.gmra.mrb[0].mxu0 %v737
        %v805 = vpop.f32.mrb[0].mxu0
        %v806 = vadd.f32 0.0, %v805
        %v807 = vpop.f32.mrb[0].mxu0
        %808 = vdwg.mxu0
        %vm809 = vcmask 57344
        %810 = vst.msk [vmem:[%s420] sm:$0x1] %vm809, %v806
        %p811 = scmp.lt.s32.totalorder %s28, 1
        %s812 = scalar_select %p811, %s28, 1
        %p813 = scmp.lt.s32.totalorder %s29, 0
        %s814 = scalar_select %p813, %s29, 0
        %s815 = smul.addr %s812, 4
        %s816 = sadd.s32 %s814, %s815
        %s817 = smul.addr %s816, 8
        %s818 = scalar_lea.vmem %s8, %s817
        %s819 = sand.u32 %s268, 1
        %s820 = scalar_lea.sflag [#allocation3], %s819
        %s821 = sand.u32 %s268, 1
        %s822 = scalar_lea.vmem [#allocation2], %s821
        // Predicated region
        $region53: #{tpu_custom_call.1} parent=51 // pred_check
          %p823 = pneg %p250
        $region54: #{tpu_custom_call.1} parent=51 // pred_check_branch
          %825 = sbr.rel (%p823) target = $region56
        $region55: #{tpu_custom_call.1} parent=51 // pred_region
          _
        $region56: #{tpu_custom_call.1} parent=51 // pred_fallthru
          _
        // Predicated region
        $region57: #{tpu_custom_call.1} parent=51 // pred_check
          %p826 = pneg %p278
        $region58: #{tpu_custom_call.1} parent=51 // pred_check_branch
          %828 = sbr.rel (%p826) target = $region60
        $region59: #{tpu_custom_call.1} parent=51 // pred_region
          %s830 = ssub.s32 16, 16
          %831 = vsyncadd %s820, %s830
          %s832 = sadd.s32 %s29, %s28
          %s833 = smul.addr %s832, 16
          %s834 = scalar_lea.hbm %s9, %s833
          %s836 = sshll.u32 %s822, 4
          %s837 = int_to_ptr.vmem [resolvable:$true] %s836
          %839 = dma.vmem_to_hbm [thread:$0]  %s837, 16, %s834, %s820
        $region60: #{tpu_custom_call.1} parent=51 // pred_fallthru
          _
      $region52: #{tpu_custom_call.1} parent=5 // pred_fallthru
        _
      %p840 = scmp.le.s32.totalorder 2, %s19
      // Predicated region
      $region61: #{tpu_custom_call.1} parent=5 // pred_check
        %p841 = pneg %p840
      $region62: #{tpu_custom_call.1} parent=5 // pred_check_branch
        %843 = sbr.rel (%p841) target = $region64
      $region63: #{tpu_custom_call.1} parent=5 // pred_region
        %s844 = ssub.s32 %s19, 2
        // Predicated region
        $region65: #{tpu_custom_call.1} parent=63 // pred_check
          %p845 = pneg %p256
        $region66: #{tpu_custom_call.1} parent=63 // pred_check_branch
          %847 = sbr.rel (%p845) target = $region68
        $region67: #{tpu_custom_call.1} parent=63 // pred_region
          %p848 = scmp.lt.s32.totalorder %s30, 1
          %s849 = scalar_select %p848, %s30, 1
          %p850 = scmp.lt.s32.totalorder %s31, 0
          %s851 = scalar_select %p850, %s31, 0
          %s852 = smul.addr %s849, 4
          %s853 = sadd.s32 %s851, %s852
          %s854 = smul.addr %s853, 8
          %s855 = scalar_lea.vmem %s8, %s854
        $region68: #{tpu_custom_call.1} parent=63 // pred_fallthru
          _
        // Predicated region
        $region69: #{tpu_custom_call.1} parent=63 // pred_check
          %p856 = pneg %p284
        $region70: #{tpu_custom_call.1} parent=63 // pred_check_branch
          %858 = sbr.rel (%p856) target = $region72
        $region71: #{tpu_custom_call.1} parent=63 // pred_region
          %s859 = sand.u32 %s269, 1
          %s860 = scalar_lea.sflag [#allocation3], %s859
          %s861 = sand.u32 %s269, 1
          %s862 = scalar_lea.vmem [#allocation2], %s861
          %863 = dma.done %s860, 16
        $region72: #{tpu_custom_call.1} parent=63 // pred_fallthru
          _
      $region64: #{tpu_custom_call.1} parent=5 // pred_fallthru
        _
    $region6: #{tpu_custom_call.1} parent=1 // loop_footer
      %s23 = sadd.s32 1, %s19
    $region7: #{tpu_custom_call.1} parent=1 // loop_footer_branch
      %18 = sbr.rel target = $region3
    $region8: #{tpu_custom_call.1} parent=1 // loop_exit
      _
    %864 = vsyncpa [#allocation3], 1
    %s865 = scalar_lea.sflag [#allocation3], 1
    %866 = vsyncpa %s865, 1

</llo_original>
